<compile_context>
chip_gen: v5e
topology: v5e:2x2
jax: 0.10.0
libtpu: 0.0.40
codegen_flags: <defaults>
</compile_context>

<pallas_src>
import functools

import jax
import jax.numpy as jnp
from jax.experimental import pallas as pl
from jax.experimental.pallas import tpu as pltpu

BN_EPS = 1e-5


def predictor_kernel(x_ref, w1_ref, gamma_ref, beta_ref, w2_ref, b2_ref,
                     o_ref, acc_ref, *, use_bf16):
    j = pl.program_id(0)

    # ---- Linear 1 (feature tile): [B, dim] @ [dim, TILE_N] -> [B, TILE_N] ----
    x = x_ref[...]
    w1 = w1_ref[...]
    if use_bf16:
        x = x.astype(jnp.bfloat16)
        w1 = w1.astype(jnp.bfloat16)
    h = jnp.dot(x, w1, preferred_element_type=jnp.float32)
    # NOTE: Linear-1 bias intentionally omitted — cancelled exactly by the
    # training-mode BatchNorm mean subtraction below.

    # ---- BatchNorm1d (training-mode batch stats; per-feature, exact because
    #      the full batch is resident in every feature tile) ----
    b = h.shape[0]
    mean = jnp.sum(h, axis=0, keepdims=True) * (1.0 / b)
    diff = h - mean
    var = jnp.sum(diff * diff, axis=0, keepdims=True) * (1.0 / b)  # biased var
    # Fold gamma into the rsqrt scale: one [1, TILE_N] multiply (EUP rsqrt).
    scale = gamma_ref[...] * jax.lax.rsqrt(var + BN_EPS)
    h_act = jnp.maximum(diff * scale + beta_ref[...], 0.0)          # ReLU

    # ---- Linear 2 partial: [B, TILE_N] @ [TILE_N, PRED_PAD] -> [B, PRED_PAD] ----
    w2 = w2_ref[...]
    if use_bf16:
        h_act = h_act.astype(jnp.bfloat16)
        w2 = w2.astype(jnp.bfloat16)
    partial = jnp.dot(h_act, w2, preferred_element_type=jnp.float32)

    @pl.when(j == 0)
    def _():
        acc_ref[...] = jnp.zeros_like(acc_ref)

    acc_ref[...] += partial

    @pl.when(j == pl.num_programs(0) - 1)
    def _():
        o_ref[...] = (acc_ref[...] + b2_ref[...]).astype(o_ref.dtype)


def _vmem_limit_bytes(B, dim, tile_n, pred_pad):
    f32 = 4
    per_step = (B * dim + dim * tile_n + 2 * tile_n
                + tile_n * pred_pad + pred_pad) * f32
    total = 2 * per_step + 3 * (B * pred_pad) * f32   # dbl-buffered ins + out + scratch
    return int(min(max(4 * total, 4 << 20), 48 << 20))


def predictor_forward(x, params, *, use_bf16_mxu=False):
    """x: [B, dim] float32.  params: dict of pre-transposed weights ([in,out])."""
    w1, gamma, beta, w2, b2 = (params["w1"], params["gamma"], params["beta"],
                               params["w2"], params["b2"])
    # params["b1"] exists for PyTorch parity but is mathematically cancelled by
    # the training-mode BatchNorm, so it is not passed to the kernel.

    B, dim = x.shape
    hidden = w1.shape[1]
    pred = w2.shape[1]

    # Lane-dense output: pad the final projection width to a multiple of 128.
    pred_pad = ((pred + 127) // 128) * 128
    if pred_pad != pred:
        w2 = jnp.pad(w2, ((0, 0), (0, pred_pad - pred)))
        b2 = jnp.pad(b2, ((0, 0), (0, pred_pad - pred)))

    # N (=hidden) tile: 256 matches the v6e/v7x 256-wide MXU (128 also fine on
    # v5e); fall back to the full width for small heads.
    if hidden % 256 == 0:
        tile_n = 256
    elif hidden % 128 == 0:
        tile_n = 128
    else:
        tile_n = hidden
    n_tiles = hidden // tile_n

    kernel = functools.partial(predictor_kernel, use_bf16=use_bf16_mxu)

    grid_spec = pltpu.PrefetchScalarGridSpec(
        num_scalar_prefetch=0,
        grid=(n_tiles,),
        in_specs=[
            pl.BlockSpec((B, dim), lambda j: (0, 0)),          # x (resident)
            pl.BlockSpec((dim, tile_n), lambda j: (0, j)),     # w1 tile
            pl.BlockSpec((1, tile_n), lambda j: (0, j)),       # gamma tile
            pl.BlockSpec((1, tile_n), lambda j: (0, j)),       # beta tile
            pl.BlockSpec((tile_n, pred_pad), lambda j: (j, 0)),  # w2 tile
            pl.BlockSpec((1, pred_pad), lambda j: (0, 0)),     # b2
        ],
        out_specs=pl.BlockSpec((B, pred_pad), lambda j: (0, 0)),  # accumulator
        scratch_shapes=[pltpu.VMEM((B, pred_pad), jnp.float32)],
    )

    out_pad = pl.pallas_call(
        kernel,
        out_shape=jax.ShapeDtypeStruct((B, pred_pad), jnp.float32),
        grid_spec=grid_spec,
        compiler_params=pltpu.CompilerParams(
            dimension_semantics=("arbitrary",),   # reduction over hidden tiles
            vmem_limit_bytes=_vmem_limit_bytes(B, dim, tile_n, pred_pad),
        ),
    )(x, w1, gamma, beta, w2, b2)

    return out_pad[:, :pred]


def init_params(key, dim, prediction_size, prediction_hidden_size):
    """Deterministic synthetic init mimicking nn.Linear's uniform(-1/sqrt(fan_in))."""
    k1, k2, k3, k4 = jax.random.split(key, 4)
    bound1 = 1.0 / (dim ** 0.5)
    bound2 = 1.0 / (prediction_hidden_size ** 0.5)
    # Stored as [in, out] (transpose of PyTorch's [out, in]).
    w1 = jax.random.uniform(k1, (dim, prediction_hidden_size), jnp.float32,
                            -bound1, bound1)
    b1 = jax.random.uniform(k2, (1, prediction_hidden_size), jnp.float32,
                            -bound1, bound1)
    w2 = jax.random.uniform(k3, (prediction_hidden_size, prediction_size),
                            jnp.float32, -bound2, bound2)
    b2 = jax.random.uniform(k4, (1, prediction_size), jnp.float32,
                            -bound2, bound2)
    gamma = jnp.ones((1, prediction_hidden_size), jnp.float32)   # BN weight
    beta = jnp.zeros((1, prediction_hidden_size), jnp.float32)   # BN bias
    return dict(w1=w1, b1=b1, gamma=gamma, beta=beta, w2=w2, b2=b2)


def reference_forward(x, params):
    """Pure-JAX reference matching PyTorch exactly (includes the b1 bias)."""
    h = x @ params["w1"] + params["b1"]
    mean = jnp.mean(h, axis=0, keepdims=True)
    var = jnp.mean((h - mean) ** 2, axis=0, keepdims=True)
    h = (h - mean) / jnp.sqrt(var + BN_EPS)
    h = h * params["gamma"] + params["beta"]
    h = jnp.maximum(h, 0.0)
    return h @ params["w2"] + params["b2"]


if __name__ == "__main__":
    # Small shapes consistent with Predictor(dim, prediction_size, hidden).
    # hidden=512 exercises the multi-tile reduction grid (2 tiles of 256).
    B = 8
    DIM = 32
    HIDDEN = 512
    PRED = 32

    key = jax.random.PRNGKey(0)
    kx, kp = jax.random.split(key)
    x = jax.random.normal(kx, (B, DIM), jnp.float32)
    params = init_params(kp, DIM, PRED, HIDDEN)

    ref = reference_forward(x, params)

    # f32 path: exact parity with the PyTorch module.
    out = jax.block_until_ready(predictor_forward(x, params))
    assert out.shape == (B, PRED)
    assert jnp.allclose(out, ref, atol=1e-4, rtol=1e-4), "f32 mismatch vs reference"

    # bf16-MXU path (v6e/v7x fast path): same kernel, loose tolerance.
    out_bf16 = jax.block_until_ready(predictor_forward(x, params, use_bf16_mxu=True))
    assert out_bf16.shape == (B, PRED)
    assert bool(jnp.all(jnp.isfinite(out_bf16)))
    assert jnp.allclose(out_bf16, ref, atol=1e-1, rtol=1e-1), "bf16 mismatch vs reference"

    print("KERNEL_OK")
</pallas_src>

<mosaic_0001>
module attributes {stable_mosaic.version = 11 : i64} {
  func.func @predictor_kernel(%arg0: i32, %arg1: memref<8x32xf32, #tpu.memory_space<vmem>>, %arg2: memref<32x256xf32, #tpu.memory_space<vmem>>, %arg3: memref<1x256xf32, #tpu.memory_space<vmem>>, %arg4: memref<1x256xf32, #tpu.memory_space<vmem>>, %arg5: memref<256x128xf32, #tpu.memory_space<vmem>>, %arg6: memref<1x128xf32, #tpu.memory_space<vmem>>, %arg7: memref<8x128xf32, #tpu.memory_space<vmem>>, %arg8: memref<8x128xf32, #tpu.memory_space<vmem>>) attributes {dimension_semantics = [#tpu.dimension_semantics<arbitrary>], iteration_bounds = array<i64: 2>, scalar_prefetch = 0 : i64, scratch_operands = 1 : i64, tpu.core_type = #tpu.core_type<tc>, window_params = [{pipeline_mode = #tpu.pipeline_mode<synchronous>, transform_indices = @transform_0, window_bounds = array<i64: 8, 32>}, {transform_indices = @transform_1, window_bounds = array<i64: 32, 256>}, {transform_indices = @transform_2, window_bounds = array<i64: 1, 256>}, {transform_indices = @transform_3, window_bounds = array<i64: 1, 256>}, {transform_indices = @transform_4, window_bounds = array<i64: 256, 128>}, {pipeline_mode = #tpu.pipeline_mode<synchronous>, transform_indices = @transform_5, window_bounds = array<i64: 1, 128>}, {pipeline_mode = #tpu.pipeline_mode<synchronous>, transform_indices = @transform_6, window_bounds = array<i64: 8, 128>}]} {
    %c0 = arith.constant 0 : index
    %c0_0 = arith.constant 0 : index
    %0 = vector.load %arg1[%c0, %c0_0] : memref<8x32xf32, #tpu.memory_space<vmem>>, vector<8x32xf32>
    %c0_1 = arith.constant 0 : index
    %c0_2 = arith.constant 0 : index
    %1 = vector.load %arg2[%c0_1, %c0_2] : memref<32x256xf32, #tpu.memory_space<vmem>>, vector<32x256xf32>
    %cst = arith.constant dense<0.000000e+00> : vector<8x256xf32>
    %2 = tpu.matmul %0, %1, %cst {dimension_numbers = #tpu.dot_dimension_numbers<[1], [0], [0], [1], [0, 0, 1, 1], [], []>} : vector<8x32xf32>, vector<32x256xf32>, vector<8x256xf32> -> vector<8x256xf32>
    %cst_3 = arith.constant dense<0.000000e+00> : vector<256xf32>
    %3 = vector.multi_reduction <add>, %2, %cst_3 [0] : vector<8x256xf32> to vector<256xf32>
    %4 = vector.shape_cast %3 : vector<256xf32> to vector<1x256xf32>
    %cst_4 = arith.constant 1.250000e-01 : f32
    %5 = vector.broadcast %cst_4 : f32 to vector<1x256xf32>
    %6 = arith.mulf %4, %5 : vector<1x256xf32>
    %7 = vector.broadcast %6 : vector<1x256xf32> to vector<8x256xf32>
    %8 = arith.subf %2, %7 : vector<8x256xf32>
    %9 = arith.mulf %8, %8 : vector<8x256xf32>
    %cst_5 = arith.constant dense<0.000000e+00> : vector<256xf32>
    %10 = vector.multi_reduction <add>, %9, %cst_5 [0] : vector<8x256xf32> to vector<256xf32>
    %11 = vector.shape_cast %10 : vector<256xf32> to vector<1x256xf32>
    %cst_6 = arith.constant 1.250000e-01 : f32
    %12 = vector.broadcast %cst_6 : f32 to vector<1x256xf32>
    %13 = arith.mulf %11, %12 : vector<1x256xf32>
    %c0_7 = arith.constant 0 : index
    %c0_8 = arith.constant 0 : index
    %14 = vector.load %arg3[%c0_7, %c0_8] : memref<1x256xf32, #tpu.memory_space<vmem>>, vector<1x256xf32>
    %cst_9 = arith.constant 9.99999974E-6 : f32
    %15 = vector.broadcast %cst_9 : f32 to vector<1x256xf32>
    %16 = arith.addf %13, %15 : vector<1x256xf32>
    %17 = math.rsqrt %16 : vector<1x256xf32>
    %18 = arith.mulf %14, %17 : vector<1x256xf32>
    %19 = vector.broadcast %18 : vector<1x256xf32> to vector<8x256xf32>
    %20 = arith.mulf %8, %19 : vector<8x256xf32>
    %c0_10 = arith.constant 0 : index
    %c0_11 = arith.constant 0 : index
    %21 = vector.load %arg4[%c0_10, %c0_11] : memref<1x256xf32, #tpu.memory_space<vmem>>, vector<1x256xf32>
    %22 = vector.broadcast %21 : vector<1x256xf32> to vector<8x256xf32>
    %23 = arith.addf %20, %22 : vector<8x256xf32>
    %cst_12 = arith.constant 0.000000e+00 : f32
    %24 = vector.broadcast %cst_12 : f32 to vector<8x256xf32>
    %25 = arith.maximumf %23, %24 : vector<8x256xf32>
    %c0_13 = arith.constant 0 : index
    %c0_14 = arith.constant 0 : index
    %26 = vector.load %arg5[%c0_13, %c0_14] : memref<256x128xf32, #tpu.memory_space<vmem>>, vector<256x128xf32>
    %cst_15 = arith.constant dense<0.000000e+00> : vector<8x128xf32>
    %27 = tpu.matmul %25, %26, %cst_15 {dimension_numbers = #tpu.dot_dimension_numbers<[1], [0], [0], [1], [0, 0, 1, 1], [], []>} : vector<8x256xf32>, vector<256x128xf32>, vector<8x128xf32> -> vector<8x128xf32>
    %c0_i32 = arith.constant 0 : i32
    %28 = arith.cmpi eq, %arg0, %c0_i32 : i32
    %29 = arith.extui %28 : i1 to i32
    %c0_i32_16 = arith.constant 0 : i32
    %30 = arith.cmpi ne, %29, %c0_i32_16 : i32
    scf.if %30 {
      %cst_22 = arith.constant 0.000000e+00 : f32
      %37 = vector.broadcast %cst_22 : f32 to vector<8x128xf32>
      %c0_23 = arith.constant 0 : index
      %c0_24 = arith.constant 0 : index
      %38 = vector.load %arg8[%c0_23, %c0_24] : memref<8x128xf32, #tpu.memory_space<vmem>>, vector<8x128xf32>
      tpu.vector_store %arg8[%c0_23, %c0_24], %37 {strides = array<i32>} : memref<8x128xf32, #tpu.memory_space<vmem>>, vector<8x128xf32>,
    } else {
    }
    %c0_17 = arith.constant 0 : index
    %c0_18 = arith.constant 0 : index
    %31 = vector.load %arg8[%c0_17, %c0_18] : memref<8x128xf32, #tpu.memory_space<vmem>>, vector<8x128xf32>
    %32 = arith.addf %31, %27 : vector<8x128xf32>
    %c0_19 = arith.constant 0 : index
    %c0_20 = arith.constant 0 : index
    %33 = vector.load %arg8[%c0_19, %c0_20] : memref<8x128xf32, #tpu.memory_space<vmem>>, vector<8x128xf32>
    tpu.vector_store %arg8[%c0_19, %c0_20], %32 {strides = array<i32>} : memref<8x128xf32, #tpu.memory_space<vmem>>, vector<8x128xf32>,
    %c1_i32 = arith.constant 1 : i32
    %34 = arith.cmpi eq, %arg0, %c1_i32 : i32
    %35 = arith.extui %34 : i1 to i32
    %c0_i32_21 = arith.constant 0 : i32
    %36 = arith.cmpi ne, %35, %c0_i32_21 : i32
    scf.if %36 {
      %c0_22 = arith.constant 0 : index
      %c0_23 = arith.constant 0 : index
      %37 = vector.load %arg8[%c0_22, %c0_23] : memref<8x128xf32, #tpu.memory_space<vmem>>, vector<8x128xf32>
      %c0_24 = arith.constant 0 : index
      %c0_25 = arith.constant 0 : index
      %38 = vector.load %arg6[%c0_24, %c0_25] : memref<1x128xf32, #tpu.memory_space<vmem>>, vector<1x128xf32>
      %39 = vector.broadcast %38 : vector<1x128xf32> to vector<8x128xf32>
      %40 = arith.addf %37, %39 : vector<8x128xf32>
      %c0_26 = arith.constant 0 : index
      %c0_27 = arith.constant 0 : index
      %41 = vector.load %arg7[%c0_26, %c0_27] : memref<8x128xf32, #tpu.memory_space<vmem>>, vector<8x128xf32>
      tpu.vector_store %arg7[%c0_26, %c0_27], %40 {strides = array<i32>} : memref<8x128xf32, #tpu.memory_space<vmem>>, vector<8x128xf32>,
    } else {
    }
    return
  }
  func.func @transform_0(%arg0: i32) -> (i32, i32) {
    %c0_i32 = arith.constant 0 : i32
    %c0_i32_0 = arith.constant 0 : i32
    %c0_i32_1 = arith.constant 0 : i32
    return %c0_i32, %c0_i32_0 : i32, i32
  }
  func.func @transform_1(%arg0: i32) -> (i32, i32) {
    %c0_i32 = arith.constant 0 : i32
    %c0_i32_0 = arith.constant 0 : i32
    return %c0_i32, %arg0 : i32, i32
  }
  func.func @transform_2(%arg0: i32) -> (i32, i32) {
    %c0_i32 = arith.constant 0 : i32
    %c0_i32_0 = arith.constant 0 : i32
    return %c0_i32, %arg0 : i32, i32
  }
  func.func @transform_3(%arg0: i32) -> (i32, i32) {
    %c0_i32 = arith.constant 0 : i32
    %c0_i32_0 = arith.constant 0 : i32
    return %c0_i32, %arg0 : i32, i32
  }
  func.func @transform_4(%arg0: i32) -> (i32, i32) {
    %c0_i32 = arith.constant 0 : i32
    %c0_i32_0 = arith.constant 0 : i32
    return %arg0, %c0_i32 : i32, i32
  }
  func.func @transform_5(%arg0: i32) -> (i32, i32) {
    %c0_i32 = arith.constant 0 : i32
    %c0_i32_0 = arith.constant 0 : i32
    %c0_i32_1 = arith.constant 0 : i32
    return %c0_i32, %c0_i32_0 : i32, i32
  }
  func.func @transform_6(%arg0: i32) -> (i32, i32) {
    %c0_i32 = arith.constant 0 : i32
    %c0_i32_0 = arith.constant 0 : i32
    %c0_i32_1 = arith.constant 0 : i32
    return %c0_i32, %c0_i32_0 : i32, i32
  }
}

</mosaic_0001>

<llo_original>
// kernel: tpu_custom_call.1
$region0: #{tpu_custom_call.1}
  #allocation0 [shape = 'u32[]', space=smem, size = 0x4, offset = 0x4, fixed_abs, tag = 'smem constant byte address 0x4 - core index']
  #allocation1 [shape = 'u32[72,128]{1,0:T(1,128)}', space=vmem, size = 0x9000, scoped, tag = 'internal scratch']
  #allocation2 [shape = 'f32[8,128]{1,0:T(8,128)}', space=vmem, size = 0x1000, scoped, tag = 'scratch operand']
  %s0 = inlined_call_operand.hbm [shape: f32[8,32], index: 0, kind: input, shape index: {}]
  %s1 = inlined_call_operand.hbm [shape: f32[32,512], index: 1, kind: input, shape index: {}]
  %s2 = inlined_call_operand.hbm [shape: f32[1,512], index: 2, kind: input, shape index: {}]
  %s3 = inlined_call_operand.hbm [shape: f32[1,512], index: 3, kind: input, shape index: {}]
  %s4 = inlined_call_operand.hbm [shape: f32[512,128], index: 4, kind: input, shape index: {}]
  %s5 = inlined_call_operand.vmem [shape: f32[1,128], index: 5, kind: input, shape index: {}]
  %s6 = inlined_call_operand.hbm [shape: f32[8,128], index: 6, kind: output, shape index: {}]
  %s7 = sld [smem:[#allocation0]]
  $region85: #{tpu_custom_call.1} parent=0
    _
  %s9 = ssub.s32 1, %s7
  %s10 = scalar_select 0, %s9, %s7
  $region1: #{tpu_custom_call.1} parent=0
    #allocation3 [shape = 'u8[4096]{0}', space=vmem, size = 0x1000, scoped, tag = 'input window, operand 0, single buffered']
    #allocation4 [shape = 's32[2]{0}', space=sflag, size = 0x8, scoped, tag = 'scoped memory for tpu_custom_call.1']
    #allocation5 [shape = 's32[2]{0}', space=sflag, size = 0x8, scoped, tag = 'scoped memory for tpu_custom_call.1']
    #allocation6 [shape = 'u8[65536]{0}', space=vmem, size = 0x10000, scoped, tag = 'input window, operand 1']
    #allocation7 [shape = 's32[2]{0}', space=sflag, size = 0x8, scoped, tag = 'scoped memory for tpu_custom_call.1']
    #allocation8 [shape = 'u8[2048]{0}', space=vmem, size = 0x800, scoped, tag = 'input window, operand 2']
    #allocation9 [shape = 'u8[2048]{0}', space=vmem, size = 0x800, scoped, tag = 'input window, operand 3']
    #allocation10 [shape = 's32[2]{0}', space=sflag, size = 0x8, scoped, tag = 'scoped memory for tpu_custom_call.1']
    #allocation11 [shape = 'u8[262144]{0}', space=vmem, size = 0x40000, scoped, tag = 'input window, operand 4']
    #allocation12 [shape = 'u8[4096]{0}', space=vmem, size = 0x1000, scoped, tag = 'output window, operand 0, single buffered']
    %11 = vsyncpa [#allocation4], 0
    %12 = vsyncpa [#allocation7], 0
    %s13 = scalar_lea.sflag [#allocation7], 1
    %14 = vsyncpa %s13, 0
    %15 = vsyncpa [#allocation10], 0
    %s16 = scalar_lea.sflag [#allocation10], 1
    %17 = vsyncpa %s16, 0
    %18 = vsyncpa [#allocation5], 0
    loop: start=0, step=1, limit=4
    $region2: #{tpu_custom_call.1} parent=1 // loop_pre_header
      _
    $region3: #{tpu_custom_call.1} parent=1 // loop_header
      %s20 = sphi 0, %s24
      %p21 = scmp.ge.s32.totalorder %s20, 4
      %s28 = sphi 0, %s28
      %s30 = sphi 0, %s28
      %s31 = sphi 0, %s30
      %s45 = sphi 0, %s31
      %s51 = sphi 0, %s53
      %s54 = sphi 0, %s51
      %s55 = sphi 0, %s54
      %s71 = sphi 0, %s55
      %s77 = sphi 0, %s79
      %s80 = sphi 0, %s77
      %s81 = sphi 0, %s80
      %s97 = sphi 0, %s81
      %s103 = sphi 0, %s105
      %s106 = sphi 0, %s103
      %s107 = sphi 0, %s106
      %s123 = sphi 0, %s107
      %s129 = sphi 0, %s131
      %s132 = sphi 0, %s129
      %s133 = sphi 0, %s132
      %s149 = sphi 0, %s133
      %s153 = sphi 0, %s153
      %s155 = sphi 0, %s153
      %s156 = sphi 0, %s155
      %s170 = sphi 0, %s156
      %s174 = sphi 0, %s174
      %s176 = sphi 0, %s174
      %s177 = sphi 0, %s176
      %s191 = sphi 0, %s177
    $region4: #{tpu_custom_call.1} parent=1 // loop_header_branch
      %23 = sbr.rel (%p21) target = $region8
    $region5: #{tpu_custom_call.1} parent=1 // loop_body
      %s25 = ssub.s32 %s20, 1
      %s26 = ssub.s32 %s20, 2
      %s27 = sadd.s32 %s20, 1
      %s29 = sadd.s32 %s28, 1
      %p32 = scmp.eq.s32.totalorder %s20, 1
      %p33 = scmp.ne.s32.totalorder %s28, %s30
      %p34 = scmp.eq.s32.totalorder %s20, 0
      %p35 = por %p33, %p34
      %p36 = scmp.ne.s32.totalorder %s28, %s30
      %p37 = scmp.eq.s32.totalorder %s25, 1
      %p38 = por %p36, %p37
      %p39 = scmp.ne.s32.totalorder %s30, %s31
      %p40 = scmp.eq.s32.totalorder %s25, 0
      %p41 = por %p39, %p40
      %p42 = scmp.ne.s32.totalorder %s30, %s31
      %p43 = scmp.eq.s32.totalorder %s26, 1
      %p44 = por %p42, %p43
      %p46 = scmp.ne.s32.totalorder %s31, %s45
      %p47 = scmp.eq.s32.totalorder %s26, 0
      %p48 = por %p46, %p47
      %s49 = ssub.s32 %s20, %s27
      %p50 = scmp.eq.s32.totalorder %s49, 0
      %s52 = sadd.s32 %s51, 1
      %s53 = scalar_select %p50, %s51, %s52
      %p56 = pneg %p50
      %p57 = scmp.eq.s32.totalorder %s20, 1
      %p58 = por %p56, %p57
      %p59 = scmp.ne.s32.totalorder %s51, %s54
      %p60 = scmp.eq.s32.totalorder %s20, 0
      %p61 = por %p59, %p60
      %p62 = scmp.ne.s32.totalorder %s51, %s54
      %p63 = scmp.eq.s32.totalorder %s25, 1
      %p64 = por %p62, %p63
      %p65 = scmp.ne.s32.totalorder %s54, %s55
      %p66 = scmp.eq.s32.totalorder %s25, 0
      %p67 = por %p65, %p66
      %p68 = scmp.ne.s32.totalorder %s54, %s55
      %p69 = scmp.eq.s32.totalorder %s26, 1
      %p70 = por %p68, %p69
      %p72 = scmp.ne.s32.totalorder %s55, %s71
      %p73 = scmp.eq.s32.totalorder %s26, 0
      %p74 = por %p72, %p73
      %s75 = ssub.s32 %s20, %s27
      %p76 = scmp.eq.s32.totalorder %s75, 0
      %s78 = sadd.s32 %s77, 1
      %s79 = scalar_select %p76, %s77, %s78
      %p82 = pneg %p76
      %p83 = scmp.eq.s32.totalorder %s20, 1
      %p84 = por %p82, %p83
      %p85 = scmp.ne.s32.totalorder %s77, %s80
      %p86 = scmp.eq.s32.totalorder %s20, 0
      %p87 = por %p85, %p86
      %p88 = scmp.ne.s32.totalorder %s77, %s80
      %p89 = scmp.eq.s32.totalorder %s25, 1
      %p90 = por %p88, %p89
      %p91 = scmp.ne.s32.totalorder %s80, %s81
      %p92 = scmp.eq.s32.totalorder %s25, 0
      %p93 = por %p91, %p92
      %p94 = scmp.ne.s32.totalorder %s80, %s81
      %p95 = scmp.eq.s32.totalorder %s26, 1
      %p96 = por %p94, %p95
      %p98 = scmp.ne.s32.totalorder %s81, %s97
      %p99 = scmp.eq.s32.totalorder %s26, 0
      %p100 = por %p98, %p99
      %s101 = ssub.s32 %s20, %s27
      %p102 = scmp.eq.s32.totalorder %s101, 0
      %s104 = sadd.s32 %s103, 1
      %s105 = scalar_select %p102, %s103, %s104
      %p108 = pneg %p102
      %p109 = scmp.eq.s32.totalorder %s20, 1
      %p110 = por %p108, %p109
      %p111 = scmp.ne.s32.totalorder %s103, %s106
      %p112 = scmp.eq.s32.totalorder %s20, 0
      %p113 = por %p111, %p112
      %p114 = scmp.ne.s32.totalorder %s103, %s106
      %p115 = scmp.eq.s32.totalorder %s25, 1
      %p116 = por %p114, %p115
      %p117 = scmp.ne.s32.totalorder %s106, %s107
      %p118 = scmp.eq.s32.totalorder %s25, 0
      %p119 = por %p117, %p118
      %p120 = scmp.ne.s32.totalorder %s106, %s107
      %p121 = scmp.eq.s32.totalorder %s26, 1
      %p122 = por %p120, %p121
      %p124 = scmp.ne.s32.totalorder %s107, %s123
      %p125 = scmp.eq.s32.totalorder %s26, 0
      %p126 = por %p124, %p125
      %s127 = ssub.s32 %s20, %s27
      %p128 = scmp.eq.s32.totalorder %s127, 0
      %s130 = sadd.s32 %s129, 1
      %s131 = scalar_select %p128, %s129, %s130
      %p134 = pneg %p128
      %p135 = scmp.eq.s32.totalorder %s20, 1
      %p136 = por %p134, %p135
      %p137 = scmp.ne.s32.totalorder %s129, %s132
      %p138 = scmp.eq.s32.totalorder %s20, 0
      %p139 = por %p137, %p138
      %p140 = scmp.ne.s32.totalorder %s129, %s132
      %p141 = scmp.eq.s32.totalorder %s25, 1
      %p142 = por %p140, %p141
      %p143 = scmp.ne.s32.totalorder %s132, %s133
      %p144 = scmp.eq.s32.totalorder %s25, 0
      %p145 = por %p143, %p144
      %p146 = scmp.ne.s32.totalorder %s132, %s133
      %p147 = scmp.eq.s32.totalorder %s26, 1
      %p148 = por %p146, %p147
      %p150 = scmp.ne.s32.totalorder %s133, %s149
      %p151 = scmp.eq.s32.totalorder %s26, 0
      %p152 = por %p150, %p151
      %s154 = sadd.s32 %s153, 1
      %p157 = scmp.eq.s32.totalorder %s20, 1
      %p158 = scmp.ne.s32.totalorder %s153, %s155
      %p159 = scmp.eq.s32.totalorder %s20, 0
      %p160 = por %p158, %p159
      %p161 = scmp.ne.s32.totalorder %s153, %s155
      %p162 = scmp.eq.s32.totalorder %s25, 1
      %p163 = por %p161, %p162
      %p164 = scmp.ne.s32.totalorder %s155, %s156
      %p165 = scmp.eq.s32.totalorder %s25, 0
      %p166 = por %p164, %p165
      %p167 = scmp.ne.s32.totalorder %s155, %s156
      %p168 = scmp.eq.s32.totalorder %s26, 1
      %p169 = por %p167, %p168
      %p171 = scmp.ne.s32.totalorder %s156, %s170
      %p172 = scmp.eq.s32.totalorder %s26, 0
      %p173 = por %p171, %p172
      %s175 = sadd.s32 %s174, 1
      %p178 = scmp.eq.s32.totalorder %s20, 1
      %p179 = scmp.ne.s32.totalorder %s174, %s176
      %p180 = scmp.eq.s32.totalorder %s20, 0
      %p181 = por %p179, %p180
      %p182 = scmp.ne.s32.totalorder %s174, %s176
      %p183 = scmp.eq.s32.totalorder %s25, 1
      %p184 = por %p182, %p183
      %p185 = scmp.ne.s32.totalorder %s176, %s177
      %p186 = scmp.eq.s32.totalorder %s25, 0
      %p187 = por %p185, %p186
      %p188 = scmp.ne.s32.totalorder %s176, %s177
      %p189 = scmp.eq.s32.totalorder %s26, 1
      %p190 = por %p188, %p189
      %p192 = scmp.ne.s32.totalorder %s177, %s191
      %p193 = scmp.eq.s32.totalorder %s26, 0
      %p194 = por %p192, %p193
      %p195 = scmp.le.s32.totalorder 1, %s20
      %p196 = scmp.lt.s32.totalorder %s20, 3
      %p197 = pnand %p195, %p196
      %p198 = pneg %p197
      // Predicated region
      $region9: #{tpu_custom_call.1} parent=5 // pred_check
        _
      $region10: #{tpu_custom_call.1} parent=5 // pred_check_branch
        %200 = sbr.rel (%p197) target = $region12
      $region11: #{tpu_custom_call.1} parent=5 // pred_region
        %s201 = ssub.s32 %s20, 1
        // Predicated region
        $region13: #{tpu_custom_call.1} parent=11 // pred_check
          %p202 = pneg %p41
        $region14: #{tpu_custom_call.1} parent=11 // pred_check_branch
          %204 = sbr.rel (%p202) target = $region16
        $region15: #{tpu_custom_call.1} parent=11 // pred_region
          %206 = vsyncadd [#allocation4], 0
          %s208 = sshll.u32 %s0, 4
          %s209 = int_to_ptr.hbm [resolvable:$true] %s208
          %s210 = sshll.u32 [#allocation3], 4
          %s211 = int_to_ptr.vmem [resolvable:$true] %s210
          %213 = dma.hbm_to_vmem [thread:$0]  %s209, 128, %s211, [#allocation4]
        $region16: #{tpu_custom_call.1} parent=11 // pred_fallthru
          _
        // Predicated region
        $region17: #{tpu_custom_call.1} parent=11 // pred_check
          %p214 = pneg %p166
        $region18: #{tpu_custom_call.1} parent=11 // pred_check_branch
          %216 = sbr.rel (%p214) target = $region20
        $region19: #{tpu_custom_call.1} parent=11 // pred_region
          _
        $region20: #{tpu_custom_call.1} parent=11 // pred_fallthru
          _
      $region12: #{tpu_custom_call.1} parent=5 // pred_fallthru
        _
      %p217 = scmp.lt.s32.totalorder %s20, 2
      // Predicated region
      $region21: #{tpu_custom_call.1} parent=5 // pred_check
        %p218 = pneg %p217
      $region22: #{tpu_custom_call.1} parent=5 // pred_check_branch
        %220 = sbr.rel (%p218) target = $region24
      $region23: #{tpu_custom_call.1} parent=5 // pred_region
        // Predicated region
        $region25: #{tpu_custom_call.1} parent=23 // pred_check
          %p221 = pneg %p61
        $region26: #{tpu_custom_call.1} parent=23 // pred_check_branch
          %223 = sbr.rel (%p221) target = $region28
        $region27: #{tpu_custom_call.1} parent=23 // pred_region
          %s224 = sand.u32 %s20, 1
          %s225 = scalar_lea.sflag [#allocation7], %s224
          %s226 = sand.u32 %s51, 1
          %s227 = smul.addr %s226, 64
          %s228 = scalar_lea.vmem [#allocation6], %s227
          %s229 = smul.u32 2, %s20
          %231 = vsyncadd %s225, 0
          %s232 = smul.addr %s229, 8
          %s233 = scalar_lea.hbm %s1, %s232
          %s234 = sshll.u32 %s233, 4
          %s235 = int_to_ptr.hbm [resolvable:$true] %s234
          %s236 = sshll.u32 %s228, 4
          %s237 = int_to_ptr.vmem [resolvable:$true] %s236
          %242 = dma.hbm_to_vmem [thread:$0]  %s235, 1024, %s237, %s225, 512, 256, 16
        $region28: #{tpu_custom_call.1} parent=23 // pred_fallthru
          _
        // Predicated region
        $region29: #{tpu_custom_call.1} parent=23 // pred_check
          %p243 = pneg %p87
        $region30: #{tpu_custom_call.1} parent=23 // pred_check_branch
          %245 = sbr.rel (%p243) target = $region32
        $region31: #{tpu_custom_call.1} parent=23 // pred_region
          %s246 = sand.u32 %s20, 1
          %s247 = scalar_lea.sflag [#allocation7], %s246
          %s248 = sand.u32 %s77, 1
          %s249 = smul.addr %s248, 2
          %s250 = scalar_lea.vmem [#allocation8], %s249
          %s251 = smul.u32 2, %s20
          %253 = vsyncadd %s247, 0
          %s254 = scalar_lea.hbm %s2, %s251
          %s256 = sshll.u32 %s254, 4
          %s257 = int_to_ptr.hbm [resolvable:$true] %s256
          %s258 = sshll.u32 %s250, 4
          %s259 = int_to_ptr.vmem [resolvable:$true] %s258
          %261 = dma.hbm_to_vmem [thread:$0]  %s257, 32, %s259, %s247
        $region32: #{tpu_custom_call.1} parent=23 // pred_fallthru
          _
        // Predicated region
        $region33: #{tpu_custom_call.1} parent=23 // pred_check
          %p262 = pneg %p113
        $region34: #{tpu_custom_call.1} parent=23 // pred_check_branch
          %264 = sbr.rel (%p262) target = $region36
        $region35: #{tpu_custom_call.1} parent=23 // pred_region
          %s265 = sand.u32 %s20, 1
          %s266 = scalar_lea.sflag [#allocation10], %s265
          %s267 = sand.u32 %s103, 1
          %s268 = smul.addr %s267, 2
          %s269 = scalar_lea.vmem [#allocation9], %s268
          %s270 = smul.u32 2, %s20
          %272 = vsyncadd %s266, 0
          %s273 = scalar_lea.hbm %s3, %s270
          %s275 = sshll.u32 %s273, 4
          %s276 = int_to_ptr.hbm [resolvable:$true] %s275
          %s277 = sshll.u32 %s269, 4
          %s278 = int_to_ptr.vmem [resolvable:$true] %s277
          %280 = dma.hbm_to_vmem [thread:$0]  %s276, 32, %s278, %s266
        $region36: #{tpu_custom_call.1} parent=23 // pred_fallthru
          _
        // Predicated region
        $region37: #{tpu_custom_call.1} parent=23 // pred_check
          %p281 = pneg %p139
        $region38: #{tpu_custom_call.1} parent=23 // pred_check_branch
          %283 = sbr.rel (%p281) target = $region40
        $region39: #{tpu_custom_call.1} parent=23 // pred_region
          %s284 = sand.u32 %s20, 1
          %s285 = scalar_lea.sflag [#allocation10], %s284
          %s286 = sand.u32 %s129, 1
          %s287 = smul.addr %s286, 256
          %s288 = scalar_lea.vmem [#allocation11], %s287
          %s289 = smul.u32 32, %s20
          %291 = vsyncadd %s285, 0
          %s292 = smul.addr %s289, 8
          %s293 = scalar_lea.hbm %s4, %s292
          %s294 = sshll.u32 %s293, 4
          %s295 = int_to_ptr.hbm [resolvable:$true] %s294
          %s296 = sshll.u32 %s288, 4
          %s297 = int_to_ptr.vmem [resolvable:$true] %s296
          %302 = dma.hbm_to_vmem [thread:$0]  %s295, 4096, %s297, %s285, 128, 128, 8
        $region40: #{tpu_custom_call.1} parent=23 // pred_fallthru
          _
      $region24: #{tpu_custom_call.1} parent=5 // pred_fallthru
        _
      %p303 = scmp.le.s32.totalorder 1, %s20
      %p304 = scmp.lt.s32.totalorder %s20, 3
      %p305 = pnand %p303, %p304
      %p306 = pneg %p305
      // Predicated region
      $region41: #{tpu_custom_call.1} parent=5 // pred_check
        _
      $region42: #{tpu_custom_call.1} parent=5 // pred_check_branch
        %308 = sbr.rel (%p305) target = $region44
      $region43: #{tpu_custom_call.1} parent=5 // pred_region
        %s309 = ssub.s32 %s20, 1
        // Predicated region
        $region45: #{tpu_custom_call.1} parent=43 // pred_check
          %p310 = pneg %p41
        $region46: #{tpu_custom_call.1} parent=43 // pred_check_branch
          %312 = sbr.rel (%p310) target = $region48
        $region47: #{tpu_custom_call.1} parent=43 // pred_region
          %314 = dma.done [#allocation4], 128
        $region48: #{tpu_custom_call.1} parent=43 // pred_fallthru
          _
        %s315 = sand.u32 %s25, 1
        %s316 = scalar_lea.sflag [#allocation7], %s315
        %s317 = sand.u32 %s54, 1
        %s318 = smul.addr %s317, 64
        %s319 = scalar_lea.vmem [#allocation6], %s318
        // Predicated region
        $region49: #{tpu_custom_call.1} parent=43 // pred_check
          %p320 = pneg %p67
        $region50: #{tpu_custom_call.1} parent=43 // pred_check_branch
          %322 = sbr.rel (%p320) target = $region52
        $region51: #{tpu_custom_call.1} parent=43 // pred_region
          %324 = dma.done %s316, 1024
        $region52: #{tpu_custom_call.1} parent=43 // pred_fallthru
          _
        %s325 = sand.u32 %s25, 1
        %s326 = scalar_lea.sflag [#allocation7], %s325
        %s327 = sand.u32 %s80, 1
        %s328 = smul.addr %s327, 2
        %s329 = scalar_lea.vmem [#allocation8], %s328
        // Predicated region
        $region53: #{tpu_custom_call.1} parent=43 // pred_check
          %p330 = pneg %p93
        $region54: #{tpu_custom_call.1} parent=43 // pred_check_branch
          %332 = sbr.rel (%p330) target = $region56
        $region55: #{tpu_custom_call.1} parent=43 // pred_region
          %334 = dma.done %s326, 32
        $region56: #{tpu_custom_call.1} parent=43 // pred_fallthru
          _
        %s335 = sand.u32 %s25, 1
        %s336 = scalar_lea.sflag [#allocation10], %s335
        %s337 = sand.u32 %s106, 1
        %s338 = smul.addr %s337, 2
        %s339 = scalar_lea.vmem [#allocation9], %s338
        // Predicated region
        $region57: #{tpu_custom_call.1} parent=43 // pred_check
          %p340 = pneg %p119
        $region58: #{tpu_custom_call.1} parent=43 // pred_check_branch
          %342 = sbr.rel (%p340) target = $region60
        $region59: #{tpu_custom_call.1} parent=43 // pred_region
          %344 = dma.done %s336, 32
        $region60: #{tpu_custom_call.1} parent=43 // pred_fallthru
          _
        %s345 = sand.u32 %s25, 1
        %s346 = scalar_lea.sflag [#allocation10], %s345
        %s347 = sand.u32 %s132, 1
        %s348 = smul.addr %s347, 256
        %s349 = scalar_lea.vmem [#allocation11], %s348
        // Predicated region
        $region61: #{tpu_custom_call.1} parent=43 // pred_check
          %p350 = pneg %p145
        $region62: #{tpu_custom_call.1} parent=43 // pred_check_branch
          %352 = sbr.rel (%p350) target = $region64
        $region63: #{tpu_custom_call.1} parent=43 // pred_region
          %354 = dma.done %s346, 4096
        $region64: #{tpu_custom_call.1} parent=43 // pred_fallthru
          _
        %p355 = pneg %p41
        %p356 = pneg %p38
        %s357 = sand.u32 %s25, 1
        %s358 = scalar_lea.sflag [#allocation7], %s357
        %s359 = sand.u32 %s54, 1
        %s360 = smul.addr %s359, 64
        %s361 = scalar_lea.vmem [#allocation6], %s360
        %p362 = pneg %p67
        %p363 = pneg %p64
        %s364 = sand.u32 %s25, 1
        %s365 = scalar_lea.sflag [#allocation7], %s364
        %s366 = sand.u32 %s80, 1
        %s367 = smul.addr %s366, 2
        %s368 = scalar_lea.vmem [#allocation8], %s367
        %p369 = pneg %p93
        %p370 = pneg %p90
        %s371 = sand.u32 %s25, 1
        %s372 = scalar_lea.sflag [#allocation10], %s371
        %s373 = sand.u32 %s106, 1
        %s374 = smul.addr %s373, 2
        %s375 = scalar_lea.vmem [#allocation9], %s374
        %p376 = pneg %p119
        %p377 = pneg %p116
        %s378 = sand.u32 %s25, 1
        %s379 = scalar_lea.sflag [#allocation10], %s378
        %s380 = sand.u32 %s132, 1
        %s381 = smul.addr %s380, 256
        %s382 = scalar_lea.vmem [#allocation11], %s381
        %p383 = pneg %p145
        %p384 = pneg %p142
        %p385 = pneg %p166
        %p386 = pneg %p163
        %p387 = pneg %p187
        %p388 = pneg %p184
        %s389 = smul.u32 2, %s25
        %s390 = smul.u32 2, %s25
        %s391 = smul.u32 2, %s25
        %s392 = smul.u32 32, %s25
        %v393 = vld [vmem:[#allocation3] sm:$0xff]
        %v394 = vld [vmem:[%s319] sm:$0xff]
        %v395 = vld [vmem:[%s319 + $0x8] sm:$0xff]
        %v396 = vld [vmem:[%s319 + $0x10] sm:$0xff]
        %v397 = vld [vmem:[%s319 + $0x18] sm:$0xff]
        %v398 = vld [vmem:[%s319 + $0x20] sm:$0xff]
        %v399 = vld [vmem:[%s319 + $0x28] sm:$0xff]
        %v400 = vld [vmem:[%s319 + $0x30] sm:$0xff]
        %v401 = vld [vmem:[%s319 + $0x38] sm:$0xff]
        %vm402 = vcmask 261120
        %v404 = vsel %vm402, %v393, 0
        %406 = vmatpush.msra.mxu0 0.0
        %407 = vmatpush.msra.mxu0 0.0
        %408 = vmatpush.msra.mxu0 0.0
        %409 = vmatpush.msra.mxu0 0.0
        %410 = vmatpush.msra.mxu0 0.0
        %411 = vmatpush.msra.mxu0 0.0
        %412 = vmatpush.msra.mxu0 0.0
        %413 = vmatpush.msra.mxu0 0.0
        %414 = vmatpush.msra.mxu0 0.0
        %415 = vmatpush.msra.mxu0 0.0
        %416 = vmatpush.msra.mxu0 0.0
        %417 = vmatpush.msra.mxu0 0.0
        %418 = vmatpush.msra.mxu0 %v400
        %419 = vmatpush.msra.mxu0 %v398
        %420 = vmatpush.msra.mxu0 %v396
        %421 = vmatpush.msra.mxu0 %v394
        %422 = vmatmul.f32.gmra.mxu0 %v404
        %v423 = vpop.f32.mrf.mxu0
        %v424 = vadd.f32 0.0, %v423
        %425 = vdwg.mxu0
        %426 = vmatpush.msra.mxu0 0.0
        %427 = vmatpush.msra.mxu0 0.0
        %428 = vmatpush.msra.mxu0 0.0
        %429 = vmatpush.msra.mxu0 0.0
        %430 = vmatpush.msra.mxu0 0.0
        %431 = vmatpush.msra.mxu0 0.0
        %432 = vmatpush.msra.mxu0 0.0
        %433 = vmatpush.msra.mxu0 0.0
        %434 = vmatpush.msra.mxu0 0.0
        %435 = vmatpush.msra.mxu0 0.0
        %436 = vmatpush.msra.mxu0 0.0
        %437 = vmatpush.msra.mxu0 0.0
        %438 = vmatpush.msra.mxu0 %v401
        %439 = vmatpush.msra.mxu0 %v399
        %440 = vmatpush.msra.mxu0 %v397
        %441 = vmatpush.msra.mxu0 %v395
        %442 = vmatmul.f32.gmra.mxu0 %v404
        %v443 = vpop.f32.mrf.mxu0
        %v444 = vadd.f32 0.0, %v443
        %445 = vdwg.mxu0
        %v446 = vrot.slane %v424, 4
        %v447 = vadd.f32 %v424, %v446
        %v448 = vrot.slane %v447, 2
        %v449 = vadd.f32 %v447, %v448
        %v450 = vrot.slane %v449, 1
        %v451 = vadd.f32 %v449, %v450
        %v452 = vrot.slane %v444, 4
        %v453 = vadd.f32 %v444, %v452
        %v454 = vrot.slane %v453, 2
        %v455 = vadd.f32 %v453, %v454
        %v456 = vrot.slane %v455, 1
        %v457 = vadd.f32 %v455, %v456
        %v458 = vmul.f32 %v451, 0.125
        %v459 = vmul.f32 %v457, 0.125
        %v460 = vsub.f32 %v424, %v458
        %v461 = vsub.f32 %v444, %v459
        %v462 = vmul.f32 %v460, %v460
        %v463 = vmul.f32 %v461, %v461
        %v464 = vrot.slane %v462, 4
        %v465 = vadd.f32 %v462, %v464
        %v466 = vrot.slane %v465, 2
        %v467 = vadd.f32 %v465, %v466
        %v468 = vrot.slane %v467, 1
        %v469 = vadd.f32 %v467, %v468
        %v470 = vrot.slane %v463, 4
        %v471 = vadd.f32 %v463, %v470
        %v472 = vrot.slane %v471, 2
        %v473 = vadd.f32 %v471, %v472
        %v474 = vrot.slane %v473, 1
        %v475 = vadd.f32 %v473, %v474
        %v476 = vmul.f32 %v469, 0.125
        %v477 = vmul.f32 %v475, 0.125
        %v478 = vld [vmem:[%s329] sm:$0x3]
        %v479 = vadd.f32 %v476, 1e-05
        %v480 = vadd.f32 %v477, 1e-05
        %v481 = vrsqrt.pop %v479
        %v482 = vmul.f32 %v481, %v479
        %v483 = vmul.f32 %v482, %v481
        %v484 = vmul.f32 0.5, %v483
        %v485 = vsub.f32 1.5, %v484
        %v486 = vmul.f32 %v481, %v485
        %vm487 = vweird.f32 %v479
        %vm488 = vweird.f32 %v481
        %vm489 = vmor %vm487, %vm488
        %v490 = vsel %vm489, %v481, %v486
        %v491 = vrsqrt.pop %v480
        %v492 = vmul.f32 %v491, %v480
        %v493 = vmul.f32 %v492, %v491
        %v494 = vmul.f32 0.5, %v493
        %v495 = vsub.f32 1.5, %v494
        %v496 = vmul.f32 %v491, %v495
        %vm497 = vweird.f32 %v480
        %vm498 = vweird.f32 %v491
        %vm499 = vmor %vm497, %vm498
        %v500 = vsel %vm499, %v491, %v496
        %v503 = vrot.slane %v500, 7
        %vm504 = vcmask 1040384
        %v505 = vsel %vm504, %v490, %v503
        %v507 = vmul.f32 %v478, %v505
        %v509 = vperm.slane %v507, 0
        %v510 = vperm.slane %v507, 1
        %v513 = vmul.f32 %v460, %v509
        %v514 = vmul.f32 %v461, %v510
        %v515 = vld [vmem:[%s339] sm:$0x3]
        %v517 = vperm.slane %v515, 0
        %v518 = vperm.slane %v515, 1
        %v521 = vadd.f32 %v513, %v517
        %v522 = vadd.f32 %v514, %v518
        %v523 = vmax.f32 %v521, 0.0
        %v524 = vmax.f32 %v522, 0.0
        %v525 = vld [vmem:[%s349] sm:$0xff]
        %v526 = vld [vmem:[%s349 + $0x8] sm:$0xff]
        %v527 = vld [vmem:[%s349 + $0x10] sm:$0xff]
        %v528 = vld [vmem:[%s349 + $0x18] sm:$0xff]
        %v529 = vld [vmem:[%s349 + $0x20] sm:$0xff]
        %v530 = vld [vmem:[%s349 + $0x28] sm:$0xff]
        %v531 = vld [vmem:[%s349 + $0x30] sm:$0xff]
        %v532 = vld [vmem:[%s349 + $0x38] sm:$0xff]
        %v533 = vld [vmem:[%s349 + $0x40] sm:$0xff]
        %v534 = vld [vmem:[%s349 + $0x48] sm:$0xff]
        %v535 = vld [vmem:[%s349 + $0x50] sm:$0xff]
        %v536 = vld [vmem:[%s349 + $0x58] sm:$0xff]
        %v537 = vld [vmem:[%s349 + $0x60] sm:$0xff]
        %v538 = vld [vmem:[%s349 + $0x68] sm:$0xff]
        %v539 = vld [vmem:[%s349 + $0x70] sm:$0xff]
        %v540 = vld [vmem:[%s349 + $0x78] sm:$0xff]
        %v541 = vld [vmem:[%s349 + $0x80] sm:$0xff]
        %v542 = vld [vmem:[%s349 + $0x88] sm:$0xff]
        %v543 = vld [vmem:[%s349 + $0x90] sm:$0xff]
        %v544 = vld [vmem:[%s349 + $0x98] sm:$0xff]
        %v545 = vld [vmem:[%s349 + $0xa0] sm:$0xff]
        %v546 = vld [vmem:[%s349 + $0xa8] sm:$0xff]
        %v547 = vld [vmem:[%s349 + $0xb0] sm:$0xff]
        %v548 = vld [vmem:[%s349 + $0xb8] sm:$0xff]
        %v549 = vld [vmem:[%s349 + $0xc0] sm:$0xff]
        %v550 = vld [vmem:[%s349 + $0xc8] sm:$0xff]
        %v551 = vld [vmem:[%s349 + $0xd0] sm:$0xff]
        %v552 = vld [vmem:[%s349 + $0xd8] sm:$0xff]
        %v553 = vld [vmem:[%s349 + $0xe0] sm:$0xff]
        %v554 = vld [vmem:[%s349 + $0xe8] sm:$0xff]
        %v555 = vld [vmem:[%s349 + $0xf0] sm:$0xff]
        %v556 = vld [vmem:[%s349 + $0xf8] sm:$0xff]
        %557 = vmatpush.msra.mxu0 %v540
        %558 = vmatpush.msra.mxu0 %v539
        %559 = vmatpush.msra.mxu0 %v538
        %560 = vmatpush.msra.mxu0 %v537
        %561 = vmatpush.msra.mxu0 %v536
        %562 = vmatpush.msra.mxu0 %v535
        %563 = vmatpush.msra.mxu0 %v534
        %564 = vmatpush.msra.mxu0 %v533
        %565 = vmatpush.msra.mxu0 %v532
        %566 = vmatpush.msra.mxu0 %v531
        %567 = vmatpush.msra.mxu0 %v530
        %568 = vmatpush.msra.mxu0 %v529
        %569 = vmatpush.msra.mxu0 %v528
        %570 = vmatpush.msra.mxu0 %v527
        %571 = vmatpush.msra.mxu0 %v526
        %572 = vmatpush.msra.mxu0 %v525
        %573 = vmatmul.f32.gmra.mxu0 %v523
        %v574 = vpop.f32.mrf.mxu0
        %v575 = vadd.f32 0.0, %v574
        %576 = vdwg.mxu0
        %577 = vmatpush.msra.mxu0 %v556
        %578 = vmatpush.msra.mxu0 %v555
        %579 = vmatpush.msra.mxu0 %v554
        %580 = vmatpush.msra.mxu0 %v553
        %581 = vmatpush.msra.mxu0 %v552
        %582 = vmatpush.msra.mxu0 %v551
        %583 = vmatpush.msra.mxu0 %v550
        %584 = vmatpush.msra.mxu0 %v549
        %585 = vmatpush.msra.mxu0 %v548
        %586 = vmatpush.msra.mxu0 %v547
        %587 = vmatpush.msra.mxu0 %v546
        %588 = vmatpush.msra.mxu0 %v545
        %589 = vmatpush.msra.mxu0 %v544
        %590 = vmatpush.msra.mxu0 %v543
        %591 = vmatpush.msra.mxu0 %v542
        %592 = vmatpush.msra.mxu0 %v541
        %593 = vmatmul.f32.gmra.mxu0 %v524
        %v594 = vpop.f32.mrf.mxu0
        %v595 = vadd.f32 %v575, %v594
        %596 = vdwg.mxu0
        %p597 = scmp.eq.s32.totalorder %s25, 0
        // Predicated region
        $region65: #{tpu_custom_call.1} parent=43 // pred_check
          %p598 = pneg %p597
        $region66: #{tpu_custom_call.1} parent=43 // pred_check_branch
          %600 = sbr.rel (%p598) target = $region68
        $region67: #{tpu_custom_call.1} parent=43 // pred_region
          %601 = vst [vmem:[#allocation2] sm:$0xff] 0.0
        $region68: #{tpu_custom_call.1} parent=43 // pred_fallthru
          _
        %v602 = vld [vmem:[#allocation2] sm:$0xff]
        %v603 = vadd.f32 %v602, %v595
        %604 = vst [vmem:[#allocation2] sm:$0xff] %v603
        %p605 = scmp.eq.s32.totalorder %s25, 1
        // Predicated region
        $region69: #{tpu_custom_call.1} parent=43 // pred_check
          %p606 = pneg %p605
        $region70: #{tpu_custom_call.1} parent=43 // pred_check_branch
          %608 = sbr.rel (%p606) target = $region72
        $region71: #{tpu_custom_call.1} parent=43 // pred_region
          %v609 = vld [vmem:[#allocation2] sm:$0xff]
          %v610 = vld [vmem:[%s5] sm:$0x1]
          %v612 = vperm.slane %v610, 0
          %v614 = vadd.f32 %v609, %v612
          %615 = vst [vmem:[#allocation12] sm:$0xff] %v614
        $region72: #{tpu_custom_call.1} parent=43 // pred_fallthru
          _
        // Predicated region
        $region73: #{tpu_custom_call.1} parent=43 // pred_check
          %p616 = pneg %p184
        $region74: #{tpu_custom_call.1} parent=43 // pred_check_branch
          %618 = sbr.rel (%p616) target = $region76
        $region75: #{tpu_custom_call.1} parent=43 // pred_region
          %620 = vsyncadd [#allocation5], 0
          %s622 = sshll.u32 [#allocation12], 4
          %s623 = int_to_ptr.vmem [resolvable:$true] %s622
          %s624 = sshll.u32 %s6, 4
          %s625 = int_to_ptr.hbm [resolvable:$true] %s624
          %627 = dma.vmem_to_hbm [thread:$0]  %s623, 128, %s625, [#allocation5]
        $region76: #{tpu_custom_call.1} parent=43 // pred_fallthru
          _
        // Predicated region
        $region77: #{tpu_custom_call.1} parent=43 // pred_check
          %p628 = pneg %p184
        $region78: #{tpu_custom_call.1} parent=43 // pred_check_branch
          %630 = sbr.rel (%p628) target = $region80
        $region79: #{tpu_custom_call.1} parent=43 // pred_region
          %632 = dma.done [#allocation5], 128
        $region80: #{tpu_custom_call.1} parent=43 // pred_fallthru
          _
      $region44: #{tpu_custom_call.1} parent=5 // pred_fallthru
        _
      %p633 = scmp.le.s32.totalorder 2, %s20
      // Predicated region
      $region81: #{tpu_custom_call.1} parent=5 // pred_check
        %p634 = pneg %p633
      $region82: #{tpu_custom_call.1} parent=5 // pred_check_branch
        %636 = sbr.rel (%p634) target = $region84
      $region83: #{tpu_custom_call.1} parent=5 // pred_region
        %s637 = ssub.s32 %s20, 2
      $region84: #{tpu_custom_call.1} parent=5 // pred_fallthru
        _
    $region6: #{tpu_custom_call.1} parent=1 // loop_footer
      %s24 = sadd.s32 1, %s20
    $region7: #{tpu_custom_call.1} parent=1 // loop_footer_branch
      %19 = sbr.rel target = $region3
    $region8: #{tpu_custom_call.1} parent=1 // loop_exit
      _
    %638 = vsyncpa [#allocation4], 1
    %s639 = scalar_lea.sflag [#allocation4], 1
    %640 = vsyncpa %s639, 1
    %641 = vsyncpa [#allocation7], 1
    %s642 = scalar_lea.sflag [#allocation7], 1
    %643 = vsyncpa %s642, 1
    %644 = vsyncpa [#allocation10], 1
    %s645 = scalar_lea.sflag [#allocation10], 1
    %646 = vsyncpa %s645, 1
    %647 = vsyncpa [#allocation5], 1
    %s648 = scalar_lea.sflag [#allocation5], 1
    %649 = vsyncpa %s648, 1

</llo_original>
